<compile_context>
chip_gen: v7x
topology: tpu7x:2x2x1
jax: 0.10.0
libtpu: 0.0.40
codegen_flags: <defaults>
</compile_context>

<pallas_src>
import numpy as np
import jax
import jax.numpy as jnp
from jax.experimental import pallas as pl
from jax.experimental.pallas import tpu as pltpu


def get_invert_permutation(perm):
    perm = np.asarray(perm)
    inv = np.empty_like(perm)
    inv[perm] = np.arange(perm.size, dtype=perm.dtype)
    return inv


# ----------------------------- Pallas kernels -----------------------------
# Lane-dense transposed layout: blocks are (depth, tile_n), batch on lanes.

def _fused_kernel_t_corr(xt_ref, zt_ref, wxt_ref, wzt_ref, bt_ref, out_ref):
    # Out^T = Wx^T @ X^T + Wz^T @ Z^T + b^T   (all static layout folded into Wx / b)
    out_ref[...] = (
        jnp.dot(wxt_ref[...], xt_ref[...], preferred_element_type=jnp.float32)
        + jnp.dot(wzt_ref[...], zt_ref[...], preferred_element_type=jnp.float32)
        + bt_ref[...]
    )


def _fused_kernel_t_nocorr(xt_ref, wxt_ref, bt_ref, out_ref):
    out_ref[...] = (
        jnp.dot(wxt_ref[...], xt_ref[...], preferred_element_type=jnp.float32)
        + bt_ref[...]
    )


# ------------------------------ wrapper ------------------------------------

class GeneratorPallas:
    """JAX/Pallas re-implementation of the PyTorch Generator module."""

    _BYPASS_B = 256      # below this batch, plain jnp (pallas fixed cost dominates)
    _MAX_TILE_N = 8192   # lane-axis tile cap (multiple of 128); ~256 KiB/buffer @ depth=8

    def __init__(self, length, partation, use_time_invariant_term, key):
        self.partation = [np.asarray(p, dtype=np.int32) for p in partation]
        self.perm = np.concatenate(self.partation)              # cat-order -> orig idx
        self.invert_partation = get_invert_permutation(self.perm)
        self.use_time_invariant_term = use_time_invariant_term
        d0 = len(self.partation[0])
        d1 = len(self.partation[1])
        self.depth = d0 + d1
        depth = self.depth

        # Deterministic PyTorch-style nn.Linear init: U(-1/sqrt(fan_in), ...)
        def linear_init(k, out_f, in_f):
            kw, kb = jax.random.split(k)
            bound = 1.0 / np.sqrt(in_f)
            w = jax.random.uniform(kw, (out_f, in_f), jnp.float32, -bound, bound)
            b = jax.random.uniform(kb, (out_f,), jnp.float32, -bound, bound)
            return w, b

        k1, k2, k3 = jax.random.split(key, 3)
        self.w1, self.b1 = linear_init(k1, d0, d0)
        self.w2, self.b2 = linear_init(k2, d1, d1)
        self.wc, self.bc = linear_init(k3, depth, depth)

        # ---- Fold ALL static layout work into fused parameters (once) ----
        # Block-diagonal weight in "cat input / cat output" order.
        w_block = jnp.zeros((depth, depth), jnp.float32)
        w_block = w_block.at[:d0, :d0].set(self.w1.T)
        w_block = w_block.at[d0:, d0:].set(self.w2.T)
        # Fold the input partition gather: consume x directly.
        wx = jnp.zeros((depth, depth), jnp.float32)
        wx = wx.at[jnp.asarray(self.perm), :].set(w_block)
        # Fold the output inverse permutation into the columns.
        wx = wx[:, jnp.asarray(self.invert_partation)]
        # Fused bias: concat(b1, b2)[invert] (+ bc if corr term is on).
        b_fused = jnp.concatenate([self.b1, self.b2])[jnp.asarray(self.invert_partation)]
        if use_time_invariant_term:
            b_fused = b_fused + self.bc

        self.wx = wx                                 # (depth_in, depth_out): out = x @ wx
        self.wz = self.wc.T                          # (depth_in, depth_out): corr = z @ wz
        self.b_fused = b_fused.reshape(1, depth)     # row bias for the bypass path

        # Transposed copies for the lane-dense kernel: Out^T = Wx^T @ X^T + ...
        self.wxt = self.wx.T                         # (depth_out, depth_in)
        self.wzt = self.wc                           # = self.wz.T
        self.bt = b_fused.reshape(depth, 1)          # (depth, 1) broadcasts over lanes

        self._fwd = jax.jit(self._forward_impl)

    # ------------------------------------------------------------------ #
    def _forward_impl(self, x, z):
        B = x.shape[0]
        depth = self.depth

        # Small-problem bypass: XLA fuses this into one tiny op; no custom-call cost.
        if B < self._BYPASS_B:
            out = x @ self.wx + self.b_fused
            if self.use_time_invariant_term:
                out = out + z @ self.wz
            return out

        # Lane-dense transposed layout: batch on the 128-lane axis (layout plumbing).
        xt = x.T                                        # (depth, B)

        # Tile: multiple of 128, as large as _MAX_TILE_N, but split into >= 2
        # "parallel" blocks whenever B allows (v7x has 2 TensorCores).
        lane_units = -(-B // 128)                       # ceil(B / 128)
        half_units = -(-lane_units // 2)
        tile_n = min(self._MAX_TILE_N, max(128, half_units * 128))
        grid = (-(-B // tile_n),)

        xt_spec = pl.BlockSpec((depth, tile_n), lambda i: (0, i))
        w_spec = pl.BlockSpec((depth, depth), lambda i: (0, 0))
        b_spec = pl.BlockSpec((depth, 1), lambda i: (0, 0))
        out_spec = pl.BlockSpec((depth, tile_n), lambda i: (0, i))
        cparams = pltpu.CompilerParams(dimension_semantics=("parallel",))

        if self.use_time_invariant_term:
            zt = z.T
            out_t = pl.pallas_call(
                _fused_kernel_t_corr,
                out_shape=jax.ShapeDtypeStruct((depth, B), jnp.float32),
                grid=grid,
                in_specs=[xt_spec, xt_spec, w_spec, w_spec, b_spec],
                out_specs=out_spec,
                compiler_params=cparams,
            )(xt, zt, self.wxt, self.wzt, self.bt)
        else:
            out_t = pl.pallas_call(
                _fused_kernel_t_nocorr,
                out_shape=jax.ShapeDtypeStruct((depth, B), jnp.float32),
                grid=grid,
                in_specs=[xt_spec, w_spec, b_spec],
                out_specs=out_spec,
                compiler_params=cparams,
            )(xt, self.wxt, self.bt)

        return out_t.T                                   # back to (B, depth)

    def __call__(self, x, z):
        return self._fwd(x, z)


# ---------------------------- reference (pure JAX) --------------------------

def reference_forward(gen, x, z):
    x1 = x[:, gen.partation[0]] @ gen.w1.T + gen.b1
    x2 = x[:, gen.partation[1]] @ gen.w2.T + gen.b2
    corr = z @ gen.wc.T + gen.bc
    hidden = jnp.concatenate([x1, x2], axis=-1)[:, gen.invert_partation]
    if gen.use_time_invariant_term:
        hidden = hidden + corr
    return hidden


if __name__ == "__main__":
    key = jax.random.PRNGKey(0)
    kparam, kparam2, kx, kz, kx2, kz2 = jax.random.split(key, 6)

    length = 8                      # unused by forward (matches module signature)
    partation = [[0, 2, 4, 6], [1, 3, 5, 7]]
    depth = 8

    # (a) Pallas lane-dense path: B=512 -> two (8, 256) "parallel" blocks.
    batch = 512
    x = jax.random.normal(kx, (batch, depth), jnp.float32)
    z = jax.random.normal(kz, (batch, depth), jnp.float32)

    gen = GeneratorPallas(length, partation, use_time_invariant_term=True, key=kparam)
    out = jax.block_until_ready(gen(x, z))
    ref = jax.block_until_ready(reference_forward(gen, x, z))
    np.testing.assert_allclose(np.asarray(out), np.asarray(ref), rtol=1e-5, atol=1e-5)

    gen_nc = GeneratorPallas(length, partation, use_time_invariant_term=False, key=kparam2)
    out_nc = jax.block_until_ready(gen_nc(x, z))
    ref_nc = jax.block_until_ready(reference_forward(gen_nc, x, z))
    np.testing.assert_allclose(np.asarray(out_nc), np.asarray(ref_nc), rtol=1e-5, atol=1e-5)

    # (b) Small-batch bypass path (original demo shape, B=8).
    xs = jax.random.normal(kx2, (8, depth), jnp.float32)
    zs = jax.random.normal(kz2, (8, depth), jnp.float32)
    out_s = jax.block_until_ready(gen(xs, zs))
    ref_s = jax.block_until_ready(reference_forward(gen, xs, zs))
    np.testing.assert_allclose(np.asarray(out_s), np.asarray(ref_s), rtol=1e-5, atol=1e-5)

    print("KERNEL_OK")
</pallas_src>

<mosaic_0001>
module attributes {stable_mosaic.version = 11 : i64} {
  func.func @_fused_kernel_t_corr(%arg0: i32, %arg1: memref<8x256xf32, #tpu.memory_space<vmem>>, %arg2: memref<8x256xf32, #tpu.memory_space<vmem>>, %arg3: memref<8x8xf32, #tpu.memory_space<vmem>>, %arg4: memref<8x8xf32, #tpu.memory_space<vmem>>, %arg5: memref<8x1xf32, #tpu.memory_space<vmem>>, %arg6: memref<8x256xf32, #tpu.memory_space<vmem>>) attributes {dimension_semantics = [#tpu.dimension_semantics<parallel>], iteration_bounds = array<i64: 2>, scalar_prefetch = 0 : i64, scratch_operands = 0 : i64, tpu.core_type = #tpu.core_type<tc>, window_params = [{transform_indices = @transform_0, window_bounds = array<i64: 8, 256>}, {transform_indices = @transform_1, window_bounds = array<i64: 8, 256>}, {pipeline_mode = #tpu.pipeline_mode<synchronous>, transform_indices = @transform_2, window_bounds = array<i64: 8, 8>}, {pipeline_mode = #tpu.pipeline_mode<synchronous>, transform_indices = @transform_3, window_bounds = array<i64: 8, 8>}, {pipeline_mode = #tpu.pipeline_mode<synchronous>, transform_indices = @transform_4, window_bounds = array<i64: 8, 1>}, {transform_indices = @transform_5, window_bounds = array<i64: 8, 256>}]} {
    %c0 = arith.constant 0 : index
    %c0_0 = arith.constant 0 : index
    %0 = vector.load %arg3[%c0, %c0_0] : memref<8x8xf32, #tpu.memory_space<vmem>>, vector<8x8xf32>
    %c0_1 = arith.constant 0 : index
    %c0_2 = arith.constant 0 : index
    %1 = vector.load %arg1[%c0_1, %c0_2] : memref<8x256xf32, #tpu.memory_space<vmem>>, vector<8x256xf32>
    %cst = arith.constant dense<0.000000e+00> : vector<8x256xf32>
    %2 = tpu.matmul %0, %1, %cst {dimension_numbers = #tpu.dot_dimension_numbers<[1], [0], [0], [1], [0, 0, 1, 1], [], []>} : vector<8x8xf32>, vector<8x256xf32>, vector<8x256xf32> -> vector<8x256xf32>
    %c0_3 = arith.constant 0 : index
    %c0_4 = arith.constant 0 : index
    %3 = vector.load %arg4[%c0_3, %c0_4] : memref<8x8xf32, #tpu.memory_space<vmem>>, vector<8x8xf32>
    %c0_5 = arith.constant 0 : index
    %c0_6 = arith.constant 0 : index
    %4 = vector.load %arg2[%c0_5, %c0_6] : memref<8x256xf32, #tpu.memory_space<vmem>>, vector<8x256xf32>
    %cst_7 = arith.constant dense<0.000000e+00> : vector<8x256xf32>
    %5 = tpu.matmul %3, %4, %cst_7 {dimension_numbers = #tpu.dot_dimension_numbers<[1], [0], [0], [1], [0, 0, 1, 1], [], []>} : vector<8x8xf32>, vector<8x256xf32>, vector<8x256xf32> -> vector<8x256xf32>
    %6 = arith.addf %2, %5 : vector<8x256xf32>
    %c0_8 = arith.constant 0 : index
    %c0_9 = arith.constant 0 : index
    %7 = vector.load %arg5[%c0_8, %c0_9] : memref<8x1xf32, #tpu.memory_space<vmem>>, vector<8x1xf32>
    %8 = vector.broadcast %7 : vector<8x1xf32> to vector<8x256xf32>
    %9 = arith.addf %6, %8 : vector<8x256xf32>
    %c0_10 = arith.constant 0 : index
    %c0_11 = arith.constant 0 : index
    %10 = vector.load %arg6[%c0_10, %c0_11] : memref<8x256xf32, #tpu.memory_space<vmem>>, vector<8x256xf32>
    tpu.vector_store %arg6[%c0_10, %c0_11], %9 {strides = array<i32>} : memref<8x256xf32, #tpu.memory_space<vmem>>, vector<8x256xf32>,
    return
  }
  func.func @transform_0(%arg0: i32) -> (i32, i32) {
    %c0_i32 = arith.constant 0 : i32
    %c0_i32_0 = arith.constant 0 : i32
    return %c0_i32, %arg0 : i32, i32
  }
  func.func @transform_1(%arg0: i32) -> (i32, i32) {
    %c0_i32 = arith.constant 0 : i32
    %c0_i32_0 = arith.constant 0 : i32
    return %c0_i32, %arg0 : i32, i32
  }
  func.func @transform_2(%arg0: i32) -> (i32, i32) {
    %c0_i32 = arith.constant 0 : i32
    %c0_i32_0 = arith.constant 0 : i32
    %c0_i32_1 = arith.constant 0 : i32
    return %c0_i32, %c0_i32_0 : i32, i32
  }
  func.func @transform_3(%arg0: i32) -> (i32, i32) {
    %c0_i32 = arith.constant 0 : i32
    %c0_i32_0 = arith.constant 0 : i32
    %c0_i32_1 = arith.constant 0 : i32
    return %c0_i32, %c0_i32_0 : i32, i32
  }
  func.func @transform_4(%arg0: i32) -> (i32, i32) {
    %c0_i32 = arith.constant 0 : i32
    %c0_i32_0 = arith.constant 0 : i32
    %c0_i32_1 = arith.constant 0 : i32
    return %c0_i32, %c0_i32_0 : i32, i32
  }
  func.func @transform_5(%arg0: i32) -> (i32, i32) {
    %c0_i32 = arith.constant 0 : i32
    %c0_i32_0 = arith.constant 0 : i32
    return %c0_i32, %arg0 : i32, i32
  }
}

</mosaic_0001>

<llo_original>
// kernel: _forward_impl.1
$region0: #{_forward_impl.1}
  #allocation0 [shape = 'u32[]', space=smem, size = 0x4, offset = 0x4, fixed_abs, tag = 'smem constant byte address 0x4 - core index']
  #allocation1 [shape = 'u32[144,128]{1,0:T(1,128)}', space=vmem, size = 0x12000, scoped, tag = 'internal scratch']
  %s0 = inlined_call_operand.hbm [shape: f32[8,512], index: 0, kind: input, shape index: {}]
  %s1 = inlined_call_operand.hbm [shape: f32[8,512], index: 1, kind: input, shape index: {}]
  %s2 = inlined_call_operand.hbm [shape: f32[8,8], index: 2, kind: input, shape index: {}]
  %s3 = inlined_call_operand.vmem [shape: f32[8,8], index: 3, kind: input, shape index: {}]
  %s4 = inlined_call_operand.vmem [shape: f32[8,1], index: 4, kind: input, shape index: {}]
  %s5 = inlined_call_operand.hbm [shape: f32[8,512], index: 5, kind: output, shape index: {}]
  %s6 = sld [smem:[#allocation0]]
  $region65: #{_forward_impl.1} parent=0
    _
  %s8 = ssub.s32 1, %s6
  %s9 = scalar_select 0, %s8, %s6
  $region1: #{_forward_impl.1} parent=0
    #allocation2 [shape = 'u8[16384]{0}', space=vmem, size = 0x4000, scoped, tag = 'input window, operand 0']
    #allocation3 [shape = 's32[2]{0}', space=sflag, size = 0x8, scoped, tag = 'scoped memory for _forward_impl.1']
    #allocation4 [shape = 's32[2]{0}', space=sflag, size = 0x8, scoped, tag = 'scoped memory for _forward_impl.1']
    #allocation5 [shape = 'u8[16384]{0}', space=vmem, size = 0x4000, scoped, tag = 'input window, operand 1']
    #allocation6 [shape = 's32[2]{0}', space=sflag, size = 0x8, scoped, tag = 'scoped memory for _forward_impl.1']
    #allocation7 [shape = 'u8[4096]{0}', space=vmem, size = 0x1000, scoped, tag = 'input window, operand 2, single buffered']
    #allocation8 [shape = 'u8[16384]{0}', space=vmem, size = 0x4000, scoped, tag = 'output window, operand 0']
    %10 = vsyncpa [#allocation3], 0
    %s11 = scalar_lea.sflag [#allocation3], 1
    %12 = vsyncpa %s11, 0
    %13 = vsyncpa [#allocation6], 0
    %s14 = scalar_lea.sflag [#allocation6], 1
    %15 = vsyncpa %s14, 0
    %16 = vsyncpa [#allocation4], 0
    %s17 = scalar_lea.sflag [#allocation4], 1
    %18 = vsyncpa %s17, 0
    loop: start=0, step=1, limit=4
    $region2: #{_forward_impl.1} parent=1 // loop_pre_header
      _
    $region3: #{_forward_impl.1} parent=1 // loop_header
      %s20 = sphi 0, %s24
      %p21 = scmp.ge.s32.totalorder %s20, 4
      %s30 = sphi 0, %s32
      %s33 = sphi 0, %s30
      %s34 = sphi 0, %s33
      %s50 = sphi 0, %s34
      %s56 = sphi 0, %s58
      %s59 = sphi 0, %s56
      %s60 = sphi 0, %s59
      %s76 = sphi 0, %s60
      %s80 = sphi 0, %s80
      %s82 = sphi 0, %s80
      %s83 = sphi 0, %s82
      %s97 = sphi 0, %s83
      %s101 = sphi 0, %s101
      %s103 = sphi 0, %s101
      %s104 = sphi 0, %s103
      %s118 = sphi 0, %s104
      %s122 = sphi 0, %s122
      %s124 = sphi 0, %s122
      %s125 = sphi 0, %s124
      %s139 = sphi 0, %s125
      %s145 = sphi 0, %s147
      %s148 = sphi 0, %s145
      %s149 = sphi 0, %s148
      %s165 = sphi 0, %s149
    $region4: #{_forward_impl.1} parent=1 // loop_header_branch
      %23 = sbr.rel (%p21) target = $region8
    $region5: #{_forward_impl.1} parent=1 // loop_body
      %s25 = ssub.s32 %s20, 1
      %s26 = ssub.s32 %s20, 2
      %s27 = sadd.s32 %s20, 1
      %s28 = ssub.s32 %s20, %s27
      %p29 = scmp.eq.s32.totalorder %s28, 0
      %s31 = sadd.s32 %s30, 1
      %s32 = scalar_select %p29, %s30, %s31
      %p35 = pneg %p29
      %p36 = scmp.eq.s32.totalorder %s20, 1
      %p37 = por %p35, %p36
      %p38 = scmp.ne.s32.totalorder %s30, %s33
      %p39 = scmp.eq.s32.totalorder %s20, 0
      %p40 = por %p38, %p39
      %p41 = scmp.ne.s32.totalorder %s30, %s33
      %p42 = scmp.eq.s32.totalorder %s25, 1
      %p43 = por %p41, %p42
      %p44 = scmp.ne.s32.totalorder %s33, %s34
      %p45 = scmp.eq.s32.totalorder %s25, 0
      %p46 = por %p44, %p45
      %p47 = scmp.ne.s32.totalorder %s33, %s34
      %p48 = scmp.eq.s32.totalorder %s26, 1
      %p49 = por %p47, %p48
      %p51 = scmp.ne.s32.totalorder %s34, %s50
      %p52 = scmp.eq.s32.totalorder %s26, 0
      %p53 = por %p51, %p52
      %s54 = ssub.s32 %s20, %s27
      %p55 = scmp.eq.s32.totalorder %s54, 0
      %s57 = sadd.s32 %s56, 1
      %s58 = scalar_select %p55, %s56, %s57
      %p61 = pneg %p55
      %p62 = scmp.eq.s32.totalorder %s20, 1
      %p63 = por %p61, %p62
      %p64 = scmp.ne.s32.totalorder %s56, %s59
      %p65 = scmp.eq.s32.totalorder %s20, 0
      %p66 = por %p64, %p65
      %p67 = scmp.ne.s32.totalorder %s56, %s59
      %p68 = scmp.eq.s32.totalorder %s25, 1
      %p69 = por %p67, %p68
      %p70 = scmp.ne.s32.totalorder %s59, %s60
      %p71 = scmp.eq.s32.totalorder %s25, 0
      %p72 = por %p70, %p71
      %p73 = scmp.ne.s32.totalorder %s59, %s60
      %p74 = scmp.eq.s32.totalorder %s26, 1
      %p75 = por %p73, %p74
      %p77 = scmp.ne.s32.totalorder %s60, %s76
      %p78 = scmp.eq.s32.totalorder %s26, 0
      %p79 = por %p77, %p78
      %s81 = sadd.s32 %s80, 1
      %p84 = scmp.eq.s32.totalorder %s20, 1
      %p85 = scmp.ne.s32.totalorder %s80, %s82
      %p86 = scmp.eq.s32.totalorder %s20, 0
      %p87 = por %p85, %p86
      %p88 = scmp.ne.s32.totalorder %s80, %s82
      %p89 = scmp.eq.s32.totalorder %s25, 1
      %p90 = por %p88, %p89
      %p91 = scmp.ne.s32.totalorder %s82, %s83
      %p92 = scmp.eq.s32.totalorder %s25, 0
      %p93 = por %p91, %p92
      %p94 = scmp.ne.s32.totalorder %s82, %s83
      %p95 = scmp.eq.s32.totalorder %s26, 1
      %p96 = por %p94, %p95
      %p98 = scmp.ne.s32.totalorder %s83, %s97
      %p99 = scmp.eq.s32.totalorder %s26, 0
      %p100 = por %p98, %p99
      %s102 = sadd.s32 %s101, 1
      %p105 = scmp.eq.s32.totalorder %s20, 1
      %p106 = scmp.ne.s32.totalorder %s101, %s103
      %p107 = scmp.eq.s32.totalorder %s20, 0
      %p108 = por %p106, %p107
      %p109 = scmp.ne.s32.totalorder %s101, %s103
      %p110 = scmp.eq.s32.totalorder %s25, 1
      %p111 = por %p109, %p110
      %p112 = scmp.ne.s32.totalorder %s103, %s104
      %p113 = scmp.eq.s32.totalorder %s25, 0
      %p114 = por %p112, %p113
      %p115 = scmp.ne.s32.totalorder %s103, %s104
      %p116 = scmp.eq.s32.totalorder %s26, 1
      %p117 = por %p115, %p116
      %p119 = scmp.ne.s32.totalorder %s104, %s118
      %p120 = scmp.eq.s32.totalorder %s26, 0
      %p121 = por %p119, %p120
      %s123 = sadd.s32 %s122, 1
      %p126 = scmp.eq.s32.totalorder %s20, 1
      %p127 = scmp.ne.s32.totalorder %s122, %s124
      %p128 = scmp.eq.s32.totalorder %s20, 0
      %p129 = por %p127, %p128
      %p130 = scmp.ne.s32.totalorder %s122, %s124
      %p131 = scmp.eq.s32.totalorder %s25, 1
      %p132 = por %p130, %p131
      %p133 = scmp.ne.s32.totalorder %s124, %s125
      %p134 = scmp.eq.s32.totalorder %s25, 0
      %p135 = por %p133, %p134
      %p136 = scmp.ne.s32.totalorder %s124, %s125
      %p137 = scmp.eq.s32.totalorder %s26, 1
      %p138 = por %p136, %p137
      %p140 = scmp.ne.s32.totalorder %s125, %s139
      %p141 = scmp.eq.s32.totalorder %s26, 0
      %p142 = por %p140, %p141
      %s143 = ssub.s32 %s20, %s27
      %p144 = scmp.eq.s32.totalorder %s143, 0
      %s146 = sadd.s32 %s145, 1
      %s147 = scalar_select %p144, %s145, %s146
      %p150 = pneg %p144
      %p151 = scmp.eq.s32.totalorder %s20, 1
      %p152 = por %p150, %p151
      %p153 = scmp.ne.s32.totalorder %s145, %s148
      %p154 = scmp.eq.s32.totalorder %s20, 0
      %p155 = por %p153, %p154
      %p156 = scmp.ne.s32.totalorder %s145, %s148
      %p157 = scmp.eq.s32.totalorder %s25, 1
      %p158 = por %p156, %p157
      %p159 = scmp.ne.s32.totalorder %s148, %s149
      %p160 = scmp.eq.s32.totalorder %s25, 0
      %p161 = por %p159, %p160
      %p162 = scmp.ne.s32.totalorder %s148, %s149
      %p163 = scmp.eq.s32.totalorder %s26, 1
      %p164 = por %p162, %p163
      %p166 = scmp.ne.s32.totalorder %s149, %s165
      %p167 = scmp.eq.s32.totalorder %s26, 0
      %p168 = por %p166, %p167
      %p169 = scmp.le.s32.totalorder 1, %s20
      %p170 = scmp.lt.s32.totalorder %s20, 3
      %p171 = pnand %p169, %p170
      %p172 = pneg %p171
      // Predicated region
      $region9: #{_forward_impl.1} parent=5 // pred_check
        _
      $region10: #{_forward_impl.1} parent=5 // pred_check_branch
        %174 = sbr.rel (%p171) target = $region12
      $region11: #{_forward_impl.1} parent=5 // pred_region
        %s175 = ssub.s32 %s20, 1
        // Predicated region
        $region13: #{_forward_impl.1} parent=11 // pred_check
          %p176 = pneg %p93
        $region14: #{_forward_impl.1} parent=11 // pred_check_branch
          %178 = sbr.rel (%p176) target = $region16
        $region15: #{_forward_impl.1} parent=11 // pred_region
          %s180 = ssub.s32 128, 128
          %181 = vsyncadd [#allocation6], %s180
          %s183 = sshll.u32 [#allocation7], 4
          %s184 = int_to_ptr.vmem [resolvable:$true] %s183
          %186 = dma.hbm_to_vmem [thread:$0]  %s2, 128, %s184, [#allocation6]
        $region16: #{_forward_impl.1} parent=11 // pred_fallthru
          _
        // Predicated region
        $region17: #{_forward_impl.1} parent=11 // pred_check
          %p187 = pneg %p114
        $region18: #{_forward_impl.1} parent=11 // pred_check_branch
          %189 = sbr.rel (%p187) target = $region20
        $region19: #{_forward_impl.1} parent=11 // pred_region
          _
        $region20: #{_forward_impl.1} parent=11 // pred_fallthru
          _
        // Predicated region
        $region21: #{_forward_impl.1} parent=11 // pred_check
          %p190 = pneg %p135
        $region22: #{_forward_impl.1} parent=11 // pred_check_branch
          %192 = sbr.rel (%p190) target = $region24
        $region23: #{_forward_impl.1} parent=11 // pred_region
          _
        $region24: #{_forward_impl.1} parent=11 // pred_fallthru
          _
      $region12: #{_forward_impl.1} parent=5 // pred_fallthru
        _
      %p193 = scmp.lt.s32.totalorder %s20, 2
      // Predicated region
      $region25: #{_forward_impl.1} parent=5 // pred_check
        %p194 = pneg %p193
      $region26: #{_forward_impl.1} parent=5 // pred_check_branch
        %196 = sbr.rel (%p194) target = $region28
      $region27: #{_forward_impl.1} parent=5 // pred_region
        // Predicated region
        $region29: #{_forward_impl.1} parent=27 // pred_check
          %p197 = pneg %p40
        $region30: #{_forward_impl.1} parent=27 // pred_check_branch
          %199 = sbr.rel (%p197) target = $region32
        $region31: #{_forward_impl.1} parent=27 // pred_region
          %s200 = sand.u32 %s30, 1
          %s201 = scalar_lea.sflag [#allocation3], %s200
          %s202 = sand.u32 %s30, 1
          %s203 = smul.addr %s202, 16
          %s204 = scalar_lea.vmem [#allocation2], %s203
          %s205 = smul.u32 2, %s20
          %s207 = ssub.s32 256, 256
          %208 = vsyncadd %s201, %s207
          %s209 = smul.addr %s205, 128
          %s210 = scalar_lea.hbm %s0, %s209
          %s212 = sshll.u32 %s204, 4
          %s213 = int_to_ptr.vmem [resolvable:$true] %s212
          %215 = dma.hbm_to_vmem [thread:$0]  %s210, 256, %s213, %s201
        $region32: #{_forward_impl.1} parent=27 // pred_fallthru
          _
        // Predicated region
        $region33: #{_forward_impl.1} parent=27 // pred_check
          %p216 = pneg %p66
        $region34: #{_forward_impl.1} parent=27 // pred_check_branch
          %218 = sbr.rel (%p216) target = $region36
        $region35: #{_forward_impl.1} parent=27 // pred_region
          %s219 = sand.u32 %s20, 1
          %s220 = scalar_lea.sflag [#allocation6], %s219
          %s221 = sand.u32 %s56, 1
          %s222 = smul.addr %s221, 16
          %s223 = scalar_lea.vmem [#allocation5], %s222
          %s224 = smul.u32 2, %s20
          %s226 = ssub.s32 256, 256
          %227 = vsyncadd %s220, %s226
          %s228 = smul.addr %s224, 128
          %s229 = scalar_lea.hbm %s1, %s228
          %s231 = sshll.u32 %s223, 4
          %s232 = int_to_ptr.vmem [resolvable:$true] %s231
          %234 = dma.hbm_to_vmem [thread:$0]  %s229, 256, %s232, %s220
        $region36: #{_forward_impl.1} parent=27 // pred_fallthru
          _
      $region28: #{_forward_impl.1} parent=5 // pred_fallthru
        _
      %p235 = scmp.le.s32.totalorder 1, %s20
      %p236 = scmp.lt.s32.totalorder %s20, 3
      %p237 = pnand %p235, %p236
      %p238 = pneg %p237
      // Predicated region
      $region37: #{_forward_impl.1} parent=5 // pred_check
        _
      $region38: #{_forward_impl.1} parent=5 // pred_check_branch
        %240 = sbr.rel (%p237) target = $region40
      $region39: #{_forward_impl.1} parent=5 // pred_region
        %s241 = ssub.s32 %s20, 1
        %s242 = sand.u32 %s33, 1
        %s243 = scalar_lea.sflag [#allocation3], %s242
        %s244 = sand.u32 %s33, 1
        %s245 = smul.addr %s244, 16
        %s246 = scalar_lea.vmem [#allocation2], %s245
        // Predicated region
        $region41: #{_forward_impl.1} parent=39 // pred_check
          %p247 = pneg %p46
        $region42: #{_forward_impl.1} parent=39 // pred_check_branch
          %249 = sbr.rel (%p247) target = $region44
        $region43: #{_forward_impl.1} parent=39 // pred_region
          %250 = dma.done %s243, 256
        $region44: #{_forward_impl.1} parent=39 // pred_fallthru
          _
        %s251 = sand.u32 %s25, 1
        %s252 = scalar_lea.sflag [#allocation6], %s251
        %s253 = sand.u32 %s59, 1
        %s254 = smul.addr %s253, 16
        %s255 = scalar_lea.vmem [#allocation5], %s254
        // Predicated region
        $region45: #{_forward_impl.1} parent=39 // pred_check
          %p256 = pneg %p72
        $region46: #{_forward_impl.1} parent=39 // pred_check_branch
          %258 = sbr.rel (%p256) target = $region48
        $region47: #{_forward_impl.1} parent=39 // pred_region
          %259 = dma.done %s252, 256
        $region48: #{_forward_impl.1} parent=39 // pred_fallthru
          _
        // Predicated region
        $region49: #{_forward_impl.1} parent=39 // pred_check
          %p260 = pneg %p93
        $region50: #{_forward_impl.1} parent=39 // pred_check_branch
          %262 = sbr.rel (%p260) target = $region52
        $region51: #{_forward_impl.1} parent=39 // pred_region
          %263 = dma.done [#allocation6], 128
        $region52: #{_forward_impl.1} parent=39 // pred_fallthru
          _
        %s264 = sand.u32 %s33, 1
        %s265 = scalar_lea.sflag [#allocation3], %s264
        %s266 = sand.u32 %s33, 1
        %s267 = smul.addr %s266, 16
        %s268 = scalar_lea.vmem [#allocation2], %s267
        %p269 = pneg %p46
        %p270 = pneg %p43
        %s271 = sand.u32 %s25, 1
        %s272 = scalar_lea.sflag [#allocation6], %s271
        %s273 = sand.u32 %s59, 1
        %s274 = smul.addr %s273, 16
        %s275 = scalar_lea.vmem [#allocation5], %s274
        %p276 = pneg %p72
        %p277 = pneg %p69
        %p278 = pneg %p93
        %p279 = pneg %p90
        %p280 = pneg %p114
        %p281 = pneg %p111
        %p282 = pneg %p135
        %p283 = pneg %p132
        %p284 = pneg %p161
        %p285 = pneg %p158
        %s286 = sand.u32 %s148, 1
        %s287 = scalar_lea.sflag [#allocation4], %s286
        %s288 = sand.u32 %s148, 1
        %s289 = smul.addr %s288, 16
        %s290 = scalar_lea.vmem [#allocation8], %s289
        %s291 = smul.u32 2, %s25
        %s292 = smul.u32 2, %s25
        %s293 = smul.u32 2, %s25
        %v294 = vld [vmem:[#allocation7] sm:$0xff]
        %v295 = vld [vmem:[%s246] sm:$0xff]
        %v296 = vld [vmem:[%s246 + $0x8] sm:$0xff]
        %v297 = vld [vmem:[%s3] sm:$0xff]
        %v298 = vld [vmem:[%s255] sm:$0xff]
        %v299 = vld [vmem:[%s255 + $0x8] sm:$0xff]
        %vm300 = vcmask 64512
        %v302 = vsel %vm300, %v297, 0
        %304 = vmatprep.subr.mxu0 %v299
        %305 = vmatpush1.msra.mxu0 %v298
        %306 = vmatprep.subr.mxu0 0.0
        %307 = vmatpush1.msra.mxu0 0.0
        %308 = vmatprep.subr.mxu0 0.0
        %309 = vmatpush1.msra.mxu0 0.0
        %310 = vmatprep.subr.mxu0 0.0
        %311 = vmatpush1.msra.mxu0 0.0
        %312 = vmatprep.subr.mxu0 0.0
        %313 = vmatpush1.msra.mxu0 0.0
        %314 = vmatprep.subr.mxu0 0.0
        %315 = vmatpush1.msra.mxu0 0.0
        %316 = vmatprep.subr.mxu0 0.0
        %317 = vmatpush1.msra.mxu0 0.0
        %318 = vmatprep.subr.mxu0 0.0
        %319 = vmatpush1.msra.mxu0 0.0
        %320 = vmatprep.subr.mxu0 0.0
        %321 = vmatpush1.msra.mxu0 0.0
        %322 = vmatprep.subr.mxu0 0.0
        %323 = vmatpush1.msra.mxu0 0.0
        %324 = vmatprep.subr.mxu0 0.0
        %325 = vmatpush1.msra.mxu0 0.0
        %326 = vmatprep.subr.mxu0 0.0
        %327 = vmatpush1.msra.mxu0 0.0
        %328 = vmatprep.subr.mxu0 0.0
        %329 = vmatpush1.msra.mxu0 0.0
        %330 = vmatprep.subr.mxu0 0.0
        %331 = vmatpush1.msra.mxu0 0.0
        %332 = vmatprep.subr.mxu0 0.0
        %333 = vmatpush1.msra.mxu0 0.0
        %334 = vmatprep.subr.mxu0 0.0
        %335 = vmatpush1.msra.mxu0 0.0
        %336 = vmatprep.subr.mxu0 0.0
        %337 = vmatpush1.msra.mxu0 0.0
        %338 = vmatprep.subr.mxu0 0.0
        %339 = vmatpush1.msra.mxu0 0.0
        %340 = vmatprep.subr.mxu0 0.0
        %341 = vmatpush1.msra.mxu0 0.0
        %342 = vmatprep.subr.mxu0 0.0
        %343 = vmatpush1.msra.mxu0 0.0
        %344 = vmatprep.subr.mxu0 0.0
        %345 = vmatpush1.msra.mxu0 0.0
        %346 = vmatprep.subr.mxu0 0.0
        %347 = vmatpush1.msra.mxu0 0.0
        %348 = vmatprep.subr.mxu0 0.0
        %349 = vmatpush1.msra.mxu0 0.0
        %350 = vmatprep.subr.mxu0 0.0
        %351 = vmatpush1.msra.mxu0 0.0
        %352 = vmatprep.subr.mxu0 0.0
        %353 = vmatpush1.msra.mxu0 0.0
        %354 = vmatprep.subr.mxu0 0.0
        %355 = vmatpush1.msra.mxu0 0.0
        %356 = vmatprep.subr.mxu0 0.0
        %357 = vmatpush1.msra.mxu0 0.0
        %358 = vmatprep.subr.mxu0 0.0
        %359 = vmatpush1.msra.mxu0 0.0
        %360 = vmatprep.subr.mxu0 0.0
        %361 = vmatpush1.msra.mxu0 0.0
        %362 = vmatprep.subr.mxu0 0.0
        %363 = vmatpush1.msra.mxu0 0.0
        %364 = vmatprep.subr.mxu0 0.0
        %365 = vmatpush1.msra.mxu0 0.0
        %366 = vmatprep.subr.mxu0 0.0
        %367 = vmatpush1.msra.mxu0 0.0
        %368 = vmatprep.mubr.f32.mxu0 0.0
        %369 = vmatmul.mubr.f32.gmra.mrb[0].mxu0 %v302
        %v370 = vpop.f32.mrb[0].mxu0
        %v371 = vadd.f32 0.0, %v370
        %v372 = vpop.f32.mrb[0].mxu0
        %v373 = vadd.f32 0.0, %v372
        %374 = vdwg.mxu0
        %v376 = vsel %vm300, %v294, 0
        %378 = vmatprep.subr.mxu0 %v296
        %379 = vmatpush1.msra.mxu0 %v295
        %380 = vmatprep.subr.mxu0 0.0
        %381 = vmatpush1.msra.mxu0 0.0
        %382 = vmatprep.subr.mxu0 0.0
        %383 = vmatpush1.msra.mxu0 0.0
        %384 = vmatprep.subr.mxu0 0.0
        %385 = vmatpush1.msra.mxu0 0.0
        %386 = vmatprep.subr.mxu0 0.0
        %387 = vmatpush1.msra.mxu0 0.0
        %388 = vmatprep.subr.mxu0 0.0
        %389 = vmatpush1.msra.mxu0 0.0
        %390 = vmatprep.subr.mxu0 0.0
        %391 = vmatpush1.msra.mxu0 0.0
        %392 = vmatprep.subr.mxu0 0.0
        %393 = vmatpush1.msra.mxu0 0.0
        %394 = vmatprep.subr.mxu0 0.0
        %395 = vmatpush1.msra.mxu0 0.0
        %396 = vmatprep.subr.mxu0 0.0
        %397 = vmatpush1.msra.mxu0 0.0
        %398 = vmatprep.subr.mxu0 0.0
        %399 = vmatpush1.msra.mxu0 0.0
        %400 = vmatprep.subr.mxu0 0.0
        %401 = vmatpush1.msra.mxu0 0.0
        %402 = vmatprep.subr.mxu0 0.0
        %403 = vmatpush1.msra.mxu0 0.0
        %404 = vmatprep.subr.mxu0 0.0
        %405 = vmatpush1.msra.mxu0 0.0
        %406 = vmatprep.subr.mxu0 0.0
        %407 = vmatpush1.msra.mxu0 0.0
        %408 = vmatprep.subr.mxu0 0.0
        %409 = vmatpush1.msra.mxu0 0.0
        %410 = vmatprep.subr.mxu0 0.0
        %411 = vmatpush1.msra.mxu0 0.0
        %412 = vmatprep.subr.mxu0 0.0
        %413 = vmatpush1.msra.mxu0 0.0
        %414 = vmatprep.subr.mxu0 0.0
        %415 = vmatpush1.msra.mxu0 0.0
        %416 = vmatprep.subr.mxu0 0.0
        %417 = vmatpush1.msra.mxu0 0.0
        %418 = vmatprep.subr.mxu0 0.0
        %419 = vmatpush1.msra.mxu0 0.0
        %420 = vmatprep.subr.mxu0 0.0
        %421 = vmatpush1.msra.mxu0 0.0
        %422 = vmatprep.subr.mxu0 0.0
        %423 = vmatpush1.msra.mxu0 0.0
        %424 = vmatprep.subr.mxu0 0.0
        %425 = vmatpush1.msra.mxu0 0.0
        %426 = vmatprep.subr.mxu0 0.0
        %427 = vmatpush1.msra.mxu0 0.0
        %428 = vmatprep.subr.mxu0 0.0
        %429 = vmatpush1.msra.mxu0 0.0
        %430 = vmatprep.subr.mxu0 0.0
        %431 = vmatpush1.msra.mxu0 0.0
        %432 = vmatprep.subr.mxu0 0.0
        %433 = vmatpush1.msra.mxu0 0.0
        %434 = vmatprep.subr.mxu0 0.0
        %435 = vmatpush1.msra.mxu0 0.0
        %436 = vmatprep.subr.mxu0 0.0
        %437 = vmatpush1.msra.mxu0 0.0
        %438 = vmatprep.subr.mxu0 0.0
        %439 = vmatpush1.msra.mxu0 0.0
        %440 = vmatprep.subr.mxu0 0.0
        %441 = vmatpush1.msra.mxu0 0.0
        %442 = vmatprep.mubr.f32.mxu0 0.0
        %443 = vmatmul.mubr.f32.gmra.mrb[0].mxu0 %v376
        %v444 = vpop.f32.mrb[0].mxu0
        %v445 = vadd.f32 %v371, %v444
        %v446 = vpop.f32.mrb[0].mxu0
        %v447 = vadd.f32 %v373, %v446
        %448 = vdwg.mxu0
        %v449 = vld [vmem:[%s4] sm:$0xff]
        %451 = vset.pattern.permute.xlu0 0
        %452 = vperm.xlu0 %451, %v449
        %v453 = vpop.permute.xlu0 %452
        %v455 = vadd.f32 %v445, %v453
        %v456 = vadd.f32 %v447, %v453
        %457 = vst [vmem:[%s290] sm:$0xff] %v455
        %458 = vst [vmem:[%s290 + $0x8] sm:$0xff] %v456
        %s459 = sand.u32 %s148, 1
        %s460 = scalar_lea.sflag [#allocation4], %s459
        %s461 = sand.u32 %s148, 1
        %s462 = smul.addr %s461, 16
        %s463 = scalar_lea.vmem [#allocation8], %s462
        // Predicated region
        $region53: #{_forward_impl.1} parent=39 // pred_check
          %p464 = pneg %p158
        $region54: #{_forward_impl.1} parent=39 // pred_check_branch
          %466 = sbr.rel (%p464) target = $region56
        $region55: #{_forward_impl.1} parent=39 // pred_region
          %s467 = smul.u32 2, %s25
          %s469 = ssub.s32 256, 256
          %470 = vsyncadd %s460, %s469
          %s471 = smul.addr %s467, 128
          %s472 = scalar_lea.hbm %s5, %s471
          %s474 = sshll.u32 %s463, 4
          %s475 = int_to_ptr.vmem [resolvable:$true] %s474
          %477 = dma.vmem_to_hbm [thread:$0]  %s475, 256, %s472, %s460
        $region56: #{_forward_impl.1} parent=39 // pred_fallthru
          _
      $region40: #{_forward_impl.1} parent=5 // pred_fallthru
        _
      %p478 = scmp.le.s32.totalorder 2, %s20
      // Predicated region
      $region57: #{_forward_impl.1} parent=5 // pred_check
        %p479 = pneg %p478
      $region58: #{_forward_impl.1} parent=5 // pred_check_branch
        %481 = sbr.rel (%p479) target = $region60
      $region59: #{_forward_impl.1} parent=5 // pred_region
        %s482 = ssub.s32 %s20, 2
        // Predicated region
        $region61: #{_forward_impl.1} parent=59 // pred_check
          %p483 = pneg %p164
        $region62: #{_forward_impl.1} parent=59 // pred_check_branch
          %485 = sbr.rel (%p483) target = $region64
        $region63: #{_forward_impl.1} parent=59 // pred_region
          %s486 = sand.u32 %s149, 1
          %s487 = scalar_lea.sflag [#allocation4], %s486
          %s488 = sand.u32 %s149, 1
          %s489 = smul.addr %s488, 16
          %s490 = scalar_lea.vmem [#allocation8], %s489
          %491 = dma.done %s487, 256
        $region64: #{_forward_impl.1} parent=59 // pred_fallthru
          _
      $region60: #{_forward_impl.1} parent=5 // pred_fallthru
        _
    $region6: #{_forward_impl.1} parent=1 // loop_footer
      %s24 = sadd.s32 1, %s20
    $region7: #{_forward_impl.1} parent=1 // loop_footer_branch
      %19 = sbr.rel target = $region3
    $region8: #{_forward_impl.1} parent=1 // loop_exit
      _
    %492 = vsyncpa [#allocation3], 1
    %s493 = scalar_lea.sflag [#allocation3], 1
    %494 = vsyncpa %s493, 1
    %495 = vsyncpa [#allocation6], 1
    %s496 = scalar_lea.sflag [#allocation6], 1
    %497 = vsyncpa %s496, 1
    %498 = vsyncpa [#allocation4], 1
    %s499 = scalar_lea.sflag [#allocation4], 1
    %500 = vsyncpa %s499, 1

</llo_original>
